<compile_context>
chip_gen: v6e
topology: v6e:2x2x1
jax: 0.10.0
libtpu: 0.0.40
codegen_flags: <defaults>
</compile_context>

<pallas_src>
import functools

import jax
import jax.numpy as jnp
from jax.experimental import pallas as pl
from jax.experimental.pallas import tpu as pltpu

# ---------------- small synthetic config ----------------
BATCH = 2
MAX_LEN = 16
WORD_DIM = 16
POS_DIM = 8
POS_DIS = 5
FILTER_NUM = 32
WINDOW = 3
HIDDEN_SIZE = 32
CLASS_NUM = 8
VOCAB = 50
DIM = WORD_DIM + 2 * POS_DIM          # 32 : conv kernel width (full feature dim)
N_POS = 2 * POS_DIS + 3
DIM_EXT = 40                          # 32 feat lanes + 1 mask-bias lane + 7 zero pad
LEX_DIM = 6 * WORD_DIM                # 96 : flattened lexical embedding
FEAT_DIM = LEX_DIM + HIDDEN_SIZE      # 128: fused head contraction dim
C_PAD = 128                           # lane-dense padded output width
NEG_BIG = 1e30                        # additive stand-in for masked_fill(-inf)


def _rc2dnn_kernel(tb, seq_len, emb_ref, lex_ref,
                   wconv_ref, wlin_ref, wdense_ref, out_ref):
    # Conv2d (kernel (WINDOW, DIM), padding=(1,0)) as WINDOW shifted
    # K=DIM_EXT MXU dots accumulated in f32.  The mask bias rides in lane
    # DIM of the centre window (wconv[1, DIM, :] == 1), so masked sequence
    # positions come out ~-1e30 and never win the maxpool.
    conv = jnp.dot(
        emb_ref[:, 0:seq_len, :].reshape(tb * seq_len, DIM_EXT),
        wconv_ref[0], preferred_element_type=jnp.float32)
    for w in range(1, WINDOW):
        conv = conv + jnp.dot(
            emb_ref[:, w:w + seq_len, :].reshape(tb * seq_len, DIM_EXT),
            wconv_ref[w], preferred_element_type=jnp.float32)

    # maxpool over the sequence (tile-aligned sublane reduce), linear -> tanh.
    pool = jnp.max(conv.reshape(tb, seq_len, FILTER_NUM), axis=1)      # (tb, F)
    sent = jnp.tanh(jnp.dot(pool, wlin_ref[...],
                            preferred_element_type=jnp.float32))       # (tb, H)

    # Fused head without the lane concat: two accumulated dots against
    # sublane-aligned row slices (rows 0:96 and 96:128) of the fused weight.
    out = (jnp.dot(lex_ref[...], wdense_ref[0:LEX_DIM, :],
                   preferred_element_type=jnp.float32)
           + jnp.dot(sent, wdense_ref[LEX_DIM:FEAT_DIM, :],
                     preferred_element_type=jnp.float32))              # (tb, 128)
    out_ref[...] = out.astype(out_ref.dtype)


def _pick_tb(batch):
    """Single block for small B; >=2-step parallel grid for large B (v7x 2 TC).

    Each batch row costs ~7 KB of double-buffered input blocks, so tb is also
    capped to stay well under the scoped VMEM limit (64 MiB physical on v7x,
    128 MiB on v5e/v6e).
    """
    half = batch // 2
    if batch >= 16 and half % 8 == 0:
        tb = min(half, 1024)
        return tb if batch % tb == 0 else half
    return batch


def rc2dnn_pallas(emb_pad, lex, w_conv, w_lin, w_dense, *, tb=None):
    """emb_pad: (B, L+2, DIM_EXT) f32, lex: (B, 96) f32; weights fused/padded."""
    B, lpad, _ = emb_pad.shape
    L = lpad - 2
    assert L % 8 == 0, "MAX_LEN must be a multiple of 8 (tile-aligned maxpool)"
    if tb is None:
        tb = _pick_tb(B)
    assert B % tb == 0
    assert tb == B or tb % 8 == 0, "tb < B must be a multiple of 8"
    grid = (B // tb,)

    def fullnd(shape):
        n = len(shape)
        return pl.BlockSpec(tuple(shape), lambda i, _n=n: (0,) * _n)

    out = pl.pallas_call(
        functools.partial(_rc2dnn_kernel, tb, L),
        out_shape=jax.ShapeDtypeStruct((B, C_PAD), jnp.float32),
        grid=grid,
        in_specs=[
            pl.BlockSpec((tb, lpad, DIM_EXT), lambda i: (i, 0, 0)),   # token feats
            pl.BlockSpec((tb, LEX_DIM), lambda i: (i, 0)),            # lexical feats
            fullnd(w_conv.shape),                                     # (3, 40, 32)
            fullnd(w_lin.shape),                                      # (32, 32)
            fullnd(w_dense.shape),                                    # (128, 128)
        ],
        out_specs=pl.BlockSpec((tb, C_PAD), lambda i: (i, 0)),
        compiler_params=pltpu.CompilerParams(
            dimension_semantics=("parallel",)),
    )(emb_pad, lex, w_conv, w_lin, w_dense)
    return out[:, :CLASS_NUM]                                          # (B, C)


def init_params(key):
    ks = jax.random.split(key, 6)
    word_vec = jax.random.normal(ks[0], (VOCAB, WORD_DIM), jnp.float32) * 0.5
    pos1 = jax.random.normal(ks[1], (N_POS, POS_DIM), jnp.float32) * 0.5
    pos2 = jax.random.normal(ks[2], (N_POS, POS_DIM), jnp.float32) * 0.5

    # Conv2d weight (F, 1, WINDOW, DIM) -> per-window (WINDOW, DIM, F), padded
    # to DIM_EXT lanes with a ones "mask-bias pickup" row in the centre window.
    conv_w = jax.random.normal(ks[3], (FILTER_NUM, 1, WINDOW, DIM), jnp.float32) * 0.1
    w3 = jnp.transpose(conv_w[:, 0], (1, 2, 0))                 # (WINDOW, DIM, F)
    w_conv = jnp.zeros((WINDOW, DIM_EXT, FILTER_NUM), jnp.float32)
    w_conv = w_conv.at[:, :DIM, :].set(w3)
    w_conv = w_conv.at[1, DIM, :].set(1.0)                      # bias lane -> all filters

    # Linear (H, F) -> (F, H)
    lin_w = jax.random.normal(ks[4], (HIDDEN_SIZE, FILTER_NUM), jnp.float32) * 0.1
    w_lin = lin_w.T

    # Dense (C, 96+32) -> fused (128, C), zero-padded to lane-dense (128, 128)
    dense_w = jax.random.normal(ks[5], (CLASS_NUM, FEAT_DIM), jnp.float32) * 0.1
    w_dense = jnp.pad(dense_w.T, ((0, 0), (0, C_PAD - CLASS_NUM)))
    return dict(word_vec=word_vec, pos1=pos1, pos2=pos2, w_conv=w_conv,
                w_lin=w_lin, w_dense=w_dense)


def rc2dnn_forward(params, data0, data1):
    token = data0[:, 0, :]
    pos1 = data0[:, 1, :]
    pos2 = data0[:, 2, :]
    mask = data0[:, 3, :]
    B = data0.shape[0]

    # TODO(synk): the embedding-table gathers stay in XLA; an in-kernel
    # one-hot-matmul gather against the (tiny) tables could remove them too.
    word_emb = params["word_vec"][token]                        # (B, L, WORD_DIM)
    p1 = params["pos1"][pos1]                                   # (B, L, POS_DIM)
    p2 = params["pos2"][pos2]                                   # (B, L, POS_DIM)

    # Additive mask bias (0 valid / -1e30 masked) folded into an extra lane of
    # the per-token features; no separate mask stream into the kernel.
    bias = (mask.astype(jnp.float32) - 1.0) * NEG_BIG           # (B, L)
    zpad = jnp.zeros((B, MAX_LEN, DIM_EXT - DIM - 1), jnp.float32)
    feat = jnp.concatenate([word_emb, p1, p2, bias[..., None], zpad], axis=-1)
    emb_pad = jnp.pad(feat, ((0, 0), (1, 1), (0, 0)))           # Conv2d padding=(1,0)

    lex = params["word_vec"][data1].reshape(B, LEX_DIM)         # (B, 96)

    return rc2dnn_pallas(emb_pad, lex, params["w_conv"],
                         params["w_lin"], params["w_dense"])


def rc2dnn_reference(params, data0, data1):
    """Pure-JAX reference reproducing the PyTorch forward (eval mode)."""
    token = data0[:, 0, :]
    pos1 = data0[:, 1, :]
    pos2 = data0[:, 2, :]
    mask = data0[:, 3, :]
    emb = jnp.concatenate([params["word_vec"][token],
                           params["pos1"][pos1],
                           params["pos2"][pos2]], axis=-1)      # (B, L, D)
    emb_pad = jnp.pad(emb, ((0, 0), (1, 1), (0, 0)))
    w3 = params["w_conv"][:, :DIM, :]                           # strip bias/pad rows
    conv = jnp.zeros((data0.shape[0], MAX_LEN, FILTER_NUM), jnp.float32)
    for w in range(WINDOW):
        conv = conv + jnp.einsum("bld,df->blf",
                                 emb_pad[:, w:w + MAX_LEN, :], w3[w])
    # NOTE: kernel uses a -1e30 additive bias instead of -inf masked_fill; they
    # only differ if an entire sequence is masked (reference -> inf/NaN).
    conv = jnp.where(mask[:, :, None] == 0, -jnp.inf, conv)
    pool = jnp.max(conv, axis=1)                                # (B, F)
    sent = jnp.tanh(pool @ params["w_lin"])                     # (B, H)
    lex = params["word_vec"][data1].reshape(data1.shape[0], LEX_DIM)
    features = jnp.concatenate([lex, sent], axis=-1)            # (B, 128)
    return features @ params["w_dense"][:, :CLASS_NUM]          # (B, C)


if __name__ == "__main__":
    key = jax.random.PRNGKey(0)
    kp, kt, k1, k2, kl = jax.random.split(key, 5)
    params = init_params(kp)

    token = jax.random.randint(kt, (BATCH, MAX_LEN), 0, VOCAB)
    pos1 = jax.random.randint(k1, (BATCH, MAX_LEN), 0, N_POS)
    pos2 = jax.random.randint(k2, (BATCH, MAX_LEN), 0, N_POS)
    # mask: first `len` positions valid, rest padding (0)
    lens = jnp.array([10, 14], dtype=jnp.int32)
    mask = (jnp.arange(MAX_LEN)[None, :] < lens[:, None]).astype(jnp.int32)
    data0 = jnp.stack([token, pos1, pos2, mask], axis=1)        # (B, 4, MAX_LEN) int32
    data1 = jax.random.randint(kl, (BATCH, 6), 0, VOCAB)        # (B, 6) lexical ids

    logits = jax.block_until_ready(jax.jit(rc2dnn_forward)(params, data0, data1))
    ref = rc2dnn_reference(params, data0, data1)

    assert logits.shape == (BATCH, CLASS_NUM), logits.shape
    assert jnp.allclose(logits, ref, atol=1e-4, rtol=1e-4), (
        f"max abs err {jnp.max(jnp.abs(logits - ref))}")
    print("KERNEL_OK")
</pallas_src>

<mosaic_0001>
module attributes {stable_mosaic.version = 11 : i64} {
  func.func @_rc2dnn_kernel(%arg0: i32, %arg1: memref<2x18x40xf32, #tpu.memory_space<vmem>>, %arg2: memref<2x96xf32, #tpu.memory_space<vmem>>, %arg3: memref<3x40x32xf32, #tpu.memory_space<vmem>>, %arg4: memref<32x32xf32, #tpu.memory_space<vmem>>, %arg5: memref<128x128xf32, #tpu.memory_space<vmem>>, %arg6: memref<2x128xf32, #tpu.memory_space<vmem>>) attributes {dimension_semantics = [#tpu.dimension_semantics<parallel>], iteration_bounds = array<i64: 1>, scalar_prefetch = 0 : i64, scratch_operands = 0 : i64, tpu.core_type = #tpu.core_type<tc>, window_params = [{transform_indices = @transform_0, window_bounds = array<i64: 2, 18, 40>}, {transform_indices = @transform_1, window_bounds = array<i64: 2, 96>}, {pipeline_mode = #tpu.pipeline_mode<synchronous>, transform_indices = @transform_2, window_bounds = array<i64: 3, 40, 32>}, {pipeline_mode = #tpu.pipeline_mode<synchronous>, transform_indices = @transform_3, window_bounds = array<i64: 32, 32>}, {pipeline_mode = #tpu.pipeline_mode<synchronous>, transform_indices = @transform_4, window_bounds = array<i64: 128, 128>}, {transform_indices = @transform_5, window_bounds = array<i64: 2, 128>}]} {
    %c0 = arith.constant 0 : index
    %c0_0 = arith.constant 0 : index
    %c0_1 = arith.constant 0 : index
    %0 = vector.load %arg1[%c0, %c0_0, %c0_1] : memref<2x18x40xf32, #tpu.memory_space<vmem>>, vector<2x16x40xf32>
    %1 = vector.shape_cast %0 : vector<2x16x40xf32> to vector<32x40xf32>
    %c0_2 = arith.constant 0 : index
    %c0_3 = arith.constant 0 : index
    %c0_4 = arith.constant 0 : index
    %2 = vector.load %arg3[%c0_2, %c0_3, %c0_4] : memref<3x40x32xf32, #tpu.memory_space<vmem>>, vector<1x40x32xf32>
    %3 = vector.shape_cast %2 : vector<1x40x32xf32> to vector<40x32xf32>
    %cst = arith.constant dense<0.000000e+00> : vector<32x32xf32>
    %4 = tpu.matmul %1, %3, %cst {dimension_numbers = #tpu.dot_dimension_numbers<[1], [0], [0], [1], [0, 0, 1, 1], [], []>} : vector<32x40xf32>, vector<40x32xf32>, vector<32x32xf32> -> vector<32x32xf32>
    %c0_5 = arith.constant 0 : index
    %c1 = arith.constant 1 : index
    %c0_6 = arith.constant 0 : index
    %5 = vector.load %arg1[%c0_5, %c1, %c0_6] : memref<2x18x40xf32, #tpu.memory_space<vmem>>, vector<2x16x40xf32>
    %6 = vector.shape_cast %5 : vector<2x16x40xf32> to vector<32x40xf32>
    %c1_7 = arith.constant 1 : index
    %c0_8 = arith.constant 0 : index
    %c0_9 = arith.constant 0 : index
    %7 = vector.load %arg3[%c1_7, %c0_8, %c0_9] : memref<3x40x32xf32, #tpu.memory_space<vmem>>, vector<1x40x32xf32>
    %8 = vector.shape_cast %7 : vector<1x40x32xf32> to vector<40x32xf32>
    %cst_10 = arith.constant dense<0.000000e+00> : vector<32x32xf32>
    %9 = tpu.matmul %6, %8, %cst_10 {dimension_numbers = #tpu.dot_dimension_numbers<[1], [0], [0], [1], [0, 0, 1, 1], [], []>} : vector<32x40xf32>, vector<40x32xf32>, vector<32x32xf32> -> vector<32x32xf32>
    %10 = arith.addf %4, %9 : vector<32x32xf32>
    %c0_11 = arith.constant 0 : index
    %c2 = arith.constant 2 : index
    %c0_12 = arith.constant 0 : index
    %11 = vector.load %arg1[%c0_11, %c2, %c0_12] : memref<2x18x40xf32, #tpu.memory_space<vmem>>, vector<2x16x40xf32>
    %12 = vector.shape_cast %11 : vector<2x16x40xf32> to vector<32x40xf32>
    %c2_13 = arith.constant 2 : index
    %c0_14 = arith.constant 0 : index
    %c0_15 = arith.constant 0 : index
    %13 = vector.load %arg3[%c2_13, %c0_14, %c0_15] : memref<3x40x32xf32, #tpu.memory_space<vmem>>, vector<1x40x32xf32>
    %14 = vector.shape_cast %13 : vector<1x40x32xf32> to vector<40x32xf32>
    %cst_16 = arith.constant dense<0.000000e+00> : vector<32x32xf32>
    %15 = tpu.matmul %12, %14, %cst_16 {dimension_numbers = #tpu.dot_dimension_numbers<[1], [0], [0], [1], [0, 0, 1, 1], [], []>} : vector<32x40xf32>, vector<40x32xf32>, vector<32x32xf32> -> vector<32x32xf32>
    %16 = arith.addf %10, %15 : vector<32x32xf32>
    %17 = vector.shape_cast %16 : vector<32x32xf32> to vector<2x16x32xf32>
    %cst_17 = arith.constant dense<0xFF800000> : vector<2x32xf32>
    %18 = vector.multi_reduction <maximumf>, %17, %cst_17 [1] : vector<2x16x32xf32> to vector<2x32xf32>
    %c0_18 = arith.constant 0 : index
    %c0_19 = arith.constant 0 : index
    %19 = vector.load %arg4[%c0_18, %c0_19] : memref<32x32xf32, #tpu.memory_space<vmem>>, vector<32x32xf32>
    %cst_20 = arith.constant dense<0.000000e+00> : vector<2x32xf32>
    %20 = tpu.matmul %18, %19, %cst_20 {dimension_numbers = #tpu.dot_dimension_numbers<[1], [0], [0], [1], [0, 0, 1, 1], [], []>} : vector<2x32xf32>, vector<32x32xf32>, vector<2x32xf32> -> vector<2x32xf32>
    %21 = math.tanh %20 : vector<2x32xf32>
    %c0_21 = arith.constant 0 : index
    %c0_22 = arith.constant 0 : index
    %22 = vector.load %arg2[%c0_21, %c0_22] : memref<2x96xf32, #tpu.memory_space<vmem>>, vector<2x96xf32>
    %c0_23 = arith.constant 0 : index
    %c0_24 = arith.constant 0 : index
    %23 = vector.load %arg5[%c0_23, %c0_24] : memref<128x128xf32, #tpu.memory_space<vmem>>, vector<96x128xf32>
    %cst_25 = arith.constant dense<0.000000e+00> : vector<2x128xf32>
    %24 = tpu.matmul %22, %23, %cst_25 {dimension_numbers = #tpu.dot_dimension_numbers<[1], [0], [0], [1], [0, 0, 1, 1], [], []>} : vector<2x96xf32>, vector<96x128xf32>, vector<2x128xf32> -> vector<2x128xf32>
    %c96 = arith.constant 96 : index
    %c0_26 = arith.constant 0 : index
    %25 = vector.load %arg5[%c96, %c0_26] : memref<128x128xf32, #tpu.memory_space<vmem>>, vector<32x128xf32>
    %cst_27 = arith.constant dense<0.000000e+00> : vector<2x128xf32>
    %26 = tpu.matmul %21, %25, %cst_27 {dimension_numbers = #tpu.dot_dimension_numbers<[1], [0], [0], [1], [0, 0, 1, 1], [], []>} : vector<2x32xf32>, vector<32x128xf32>, vector<2x128xf32> -> vector<2x128xf32>
    %27 = arith.addf %24, %26 : vector<2x128xf32>
    %c0_28 = arith.constant 0 : index
    %c0_29 = arith.constant 0 : index
    %28 = vector.load %arg6[%c0_28, %c0_29] : memref<2x128xf32, #tpu.memory_space<vmem>>, vector<2x128xf32>
    tpu.vector_store %arg6[%c0_28, %c0_29], %27 {strides = array<i32>} : memref<2x128xf32, #tpu.memory_space<vmem>>, vector<2x128xf32>,
    return
  }
  func.func @transform_0(%arg0: i32) -> (i32, i32, i32) {
    %c0_i32 = arith.constant 0 : i32
    %c0_i32_0 = arith.constant 0 : i32
    %c0_i32_1 = arith.constant 0 : i32
    return %arg0, %c0_i32, %c0_i32_0 : i32, i32, i32
  }
  func.func @transform_1(%arg0: i32) -> (i32, i32) {
    %c0_i32 = arith.constant 0 : i32
    %c0_i32_0 = arith.constant 0 : i32
    return %arg0, %c0_i32 : i32, i32
  }
  func.func @transform_2(%arg0: i32) -> (i32, i32, i32) {
    %c0_i32 = arith.constant 0 : i32
    %c0_i32_0 = arith.constant 0 : i32
    %c0_i32_1 = arith.constant 0 : i32
    %c0_i32_2 = arith.constant 0 : i32
    return %c0_i32, %c0_i32_0, %c0_i32_1 : i32, i32, i32
  }
  func.func @transform_3(%arg0: i32) -> (i32, i32) {
    %c0_i32 = arith.constant 0 : i32
    %c0_i32_0 = arith.constant 0 : i32
    %c0_i32_1 = arith.constant 0 : i32
    return %c0_i32, %c0_i32_0 : i32, i32
  }
  func.func @transform_4(%arg0: i32) -> (i32, i32) {
    %c0_i32 = arith.constant 0 : i32
    %c0_i32_0 = arith.constant 0 : i32
    %c0_i32_1 = arith.constant 0 : i32
    return %c0_i32, %c0_i32_0 : i32, i32
  }
  func.func @transform_5(%arg0: i32) -> (i32, i32) {
    %c0_i32 = arith.constant 0 : i32
    %c0_i32_0 = arith.constant 0 : i32
    return %arg0, %c0_i32 : i32, i32
  }
}

</mosaic_0001>

<llo_original>
// kernel: rc2dnn_forward.1
$region0: #{rc2dnn_forward.1}
  #allocation0 [shape = 'u32[]', space=smem, size = 0x4, offset = 0x4, fixed_abs, tag = 'smem constant byte address 0x4 - core index']
  #allocation1 [shape = 'u32[144,128]{1,0:T(1,128)}', space=vmem, size = 0x12000, scoped, tag = 'internal scratch']
  %s0 = inlined_call_operand.vmem [shape: f32[2,18,40], index: 0, kind: input, shape index: {}]
  %s1 = inlined_call_operand.vmem [shape: f32[2,96], index: 1, kind: input, shape index: {}]
  %s2 = inlined_call_operand.vmem [shape: f32[3,40,32], index: 2, kind: input, shape index: {}]
  %s3 = inlined_call_operand.vmem [shape: f32[32,32], index: 3, kind: input, shape index: {}]
  %s4 = inlined_call_operand.vmem [shape: f32[128,128], index: 4, kind: input, shape index: {}]
  %s5 = inlined_call_operand.hbm [shape: f32[2,128], index: 5, kind: output, shape index: {}]
  %s6 = sld [smem:[#allocation0]]
  $region30: #{rc2dnn_forward.1} parent=0
    _
  %s8 = ssub.s32 1, %s6
  %s9 = scalar_select 0, %s8, %s6
  $region1: #{rc2dnn_forward.1} parent=0
    #allocation2 [shape = 'u8[1024]{0}', space=vmem, size = 0x400, scoped, tag = 'output window, operand 0, single buffered']
    #allocation3 [shape = 's32[1]{0}', space=sflag, size = 0x4, scoped, tag = 'scoped memory for rc2dnn_forward.1']
    %10 = vsyncpa [#allocation3], 0
    // Predicated region
    $region2: #{rc2dnn_forward.1} parent=1 // pred_check
      _
    $region3: #{rc2dnn_forward.1} parent=1 // pred_check_branch
      %12 = sbr.rel (0) target = $region5
    $region4: #{rc2dnn_forward.1} parent=1 // pred_region
      _
    $region5: #{rc2dnn_forward.1} parent=1 // pred_fallthru
      _
    // Predicated region
    $region6: #{rc2dnn_forward.1} parent=1 // pred_check
      _
    $region7: #{rc2dnn_forward.1} parent=1 // pred_check_branch
      %14 = sbr.rel (0) target = $region9
    $region8: #{rc2dnn_forward.1} parent=1 // pred_region
      _
    $region9: #{rc2dnn_forward.1} parent=1 // pred_fallthru
      _
    // Predicated region
    $region10: #{rc2dnn_forward.1} parent=1 // pred_check
      _
    $region11: #{rc2dnn_forward.1} parent=1 // pred_check_branch
      %16 = sbr.rel (0) target = $region13
    $region12: #{rc2dnn_forward.1} parent=1 // pred_region
      _
    $region13: #{rc2dnn_forward.1} parent=1 // pred_fallthru
      _
    // Predicated region
    $region14: #{rc2dnn_forward.1} parent=1 // pred_check
      _
    $region15: #{rc2dnn_forward.1} parent=1 // pred_check_branch
      %18 = sbr.rel (0) target = $region17
    $region16: #{rc2dnn_forward.1} parent=1 // pred_region
      _
    $region17: #{rc2dnn_forward.1} parent=1 // pred_fallthru
      _
    // Predicated region
    $region18: #{rc2dnn_forward.1} parent=1 // pred_check
      _
    $region19: #{rc2dnn_forward.1} parent=1 // pred_check_branch
      %20 = sbr.rel (0) target = $region21
    $region20: #{rc2dnn_forward.1} parent=1 // pred_region
      _
    $region21: #{rc2dnn_forward.1} parent=1 // pred_fallthru
      _
    %v21 = vld [vmem:[%s0] sm:$0xff]
    %v22 = vld [vmem:[%s0 + $0x8] sm:$0xff]
    %v23 = vld [vmem:[%s0 + $0x18] sm:$0xff]
    %v24 = vld [vmem:[%s0 + $0x20] sm:$0xff]
    %v25 = vld [vmem:[%s2] sm:$0xff]
    %v26 = vld [vmem:[%s2 + $0x8] sm:$0xff]
    %v27 = vld [vmem:[%s2 + $0x10] sm:$0xff]
    %v28 = vld [vmem:[%s2 + $0x18] sm:$0xff]
    %v29 = vld [vmem:[%s2 + $0x20] sm:$0xff]
    %v30 = vld [vmem:[%s0 + $0x1] sm:$0xff]
    %v31 = vld [vmem:[%s0 + $0x9] sm:$0xff]
    %v32 = vld [vmem:[%s0 + $0x19] sm:$0xff]
    %v33 = vld [vmem:[%s0 + $0x21] sm:$0xff]
    %s34 = scalar_lea.vmem %s2, 40
    %v35 = vld [vmem:[%s34] sm:$0xff]
    %v36 = vld [vmem:[%s34 + $0x8] sm:$0xff]
    %v37 = vld [vmem:[%s34 + $0x10] sm:$0xff]
    %v38 = vld [vmem:[%s34 + $0x18] sm:$0xff]
    %v39 = vld [vmem:[%s34 + $0x20] sm:$0xff]
    %vm40 = vcmask 326656
    %v42 = vsel %vm40, %v30, 0
    %v45 = vsel %vm40, %v31, 0
    %v48 = vsel %vm40, %v32, 0
    %v51 = vsel %vm40, %v33, 0
    %53 = vmatprep.subr.mxu0 0.0
    %54 = vmatpush1.msra.mxu0 0.0
    %55 = vmatprep.subr.mxu0 0.0
    %56 = vmatpush1.msra.mxu0 0.0
    %57 = vmatprep.subr.mxu0 0.0
    %58 = vmatpush1.msra.mxu0 0.0
    %59 = vmatprep.subr.mxu0 0.0
    %60 = vmatpush1.msra.mxu0 0.0
    %61 = vmatprep.subr.mxu0 0.0
    %62 = vmatpush1.msra.mxu0 0.0
    %63 = vmatprep.subr.mxu0 0.0
    %64 = vmatpush1.msra.mxu0 0.0
    %65 = vmatprep.subr.mxu0 0.0
    %66 = vmatpush1.msra.mxu0 0.0
    %67 = vmatprep.subr.mxu0 0.0
    %68 = vmatpush1.msra.mxu0 0.0
    %69 = vmatprep.subr.mxu0 0.0
    %70 = vmatpush1.msra.mxu0 0.0
    %71 = vmatprep.subr.mxu0 0.0
    %72 = vmatpush1.msra.mxu0 0.0
    %73 = vmatprep.subr.mxu0 0.0
    %74 = vmatpush1.msra.mxu0 0.0
    %75 = vmatprep.subr.mxu0 0.0
    %76 = vmatpush1.msra.mxu0 %v39
    %77 = vmatprep.subr.mxu0 0.0
    %78 = vmatpush1.msra.mxu0 %v38
    %79 = vmatprep.subr.mxu0 0.0
    %80 = vmatpush1.msra.mxu0 %v37
    %81 = vmatprep.subr.mxu0 0.0
    %82 = vmatpush1.msra.mxu0 %v36
    %83 = vmatprep.subr.mxu0 0.0
    %84 = vmatpush1.msra.mxu0 %v35
    %85 = vmatprep.subr.mxu0 0.0
    %86 = vmatpush2.msra.mxu0 0.0
    %87 = vmatprep.subr.mxu0 0.0
    %88 = vmatpush2.msra.mxu0 0.0
    %89 = vmatprep.subr.mxu0 0.0
    %90 = vmatpush2.msra.mxu0 0.0
    %91 = vmatprep.subr.mxu0 0.0
    %92 = vmatpush2.msra.mxu0 0.0
    %93 = vmatprep.subr.mxu0 0.0
    %94 = vmatpush2.msra.mxu0 0.0
    %95 = vmatprep.subr.mxu0 0.0
    %96 = vmatpush2.msra.mxu0 0.0
    %97 = vmatprep.subr.mxu0 0.0
    %98 = vmatpush2.msra.mxu0 0.0
    %99 = vmatprep.subr.mxu0 0.0
    %100 = vmatpush2.msra.mxu0 0.0
    %101 = vmatprep.subr.mxu0 0.0
    %102 = vmatpush2.msra.mxu0 0.0
    %103 = vmatprep.subr.mxu0 0.0
    %104 = vmatpush2.msra.mxu0 0.0
    %105 = vmatprep.subr.mxu0 0.0
    %106 = vmatpush2.msra.mxu0 0.0
    %107 = vmatprep.subr.mxu0 0.0
    %108 = vmatpush2.msra.mxu0 0.0
    %109 = vmatprep.subr.mxu0 0.0
    %110 = vmatpush2.msra.mxu0 0.0
    %111 = vmatprep.subr.mxu0 0.0
    %112 = vmatpush2.msra.mxu0 0.0
    %113 = vmatprep.subr.mxu0 0.0
    %114 = vmatpush2.msra.mxu0 0.0
    %115 = vmatprep.subr.mxu0 0.0
    %116 = vmatpush2.msra.mxu0 0.0
    %117 = vmatprep.mubr.f32.mxu0 0.0
    %118 = vmatmul.mubr.f32.gmra.mxu0 %v42
    %v119 = vpop.f32.mrf.mxu0
    %v120 = vadd.f32 0.0, %v119
    %v121 = vpop.f32.mrf.mxu0
    %122 = vmatprep.mubr.f32.mxu0 0.0
    %123 = vmatmul.mubr.f32.gmra.mxu0 %v45
    %v124 = vpop.f32.mrf.mxu0
    %v125 = vadd.f32 0.0, %v124
    %v126 = vpop.f32.mrf.mxu0
    %127 = vmatprep.mubr.f32.mxu0 0.0
    %128 = vmatmul.mubr.f32.gmra.mxu0 %v48
    %v129 = vpop.f32.mrf.mxu0
    %v130 = vadd.f32 0.0, %v129
    %v131 = vpop.f32.mrf.mxu0
    %132 = vmatprep.mubr.f32.mxu0 0.0
    %133 = vmatmul.mubr.f32.gmra.mxu0 %v51
    %v134 = vpop.f32.mrf.mxu0
    %v135 = vadd.f32 0.0, %v134
    %v136 = vpop.f32.mrf.mxu0
    %137 = vdwg.mxu0
    %v139 = vsel %vm40, %v21, 0
    %v142 = vsel %vm40, %v22, 0
    %v145 = vsel %vm40, %v23, 0
    %v148 = vsel %vm40, %v24, 0
    %150 = vmatprep.subr.mxu0 0.0
    %151 = vmatpush1.msra.mxu0 0.0
    %152 = vmatprep.subr.mxu0 0.0
    %153 = vmatpush1.msra.mxu0 0.0
    %154 = vmatprep.subr.mxu0 0.0
    %155 = vmatpush1.msra.mxu0 0.0
    %156 = vmatprep.subr.mxu0 0.0
    %157 = vmatpush1.msra.mxu0 0.0
    %158 = vmatprep.subr.mxu0 0.0
    %159 = vmatpush1.msra.mxu0 0.0
    %160 = vmatprep.subr.mxu0 0.0
    %161 = vmatpush1.msra.mxu0 0.0
    %162 = vmatprep.subr.mxu0 0.0
    %163 = vmatpush1.msra.mxu0 0.0
    %164 = vmatprep.subr.mxu0 0.0
    %165 = vmatpush1.msra.mxu0 0.0
    %166 = vmatprep.subr.mxu0 0.0
    %167 = vmatpush1.msra.mxu0 0.0
    %168 = vmatprep.subr.mxu0 0.0
    %169 = vmatpush1.msra.mxu0 0.0
    %170 = vmatprep.subr.mxu0 0.0
    %171 = vmatpush1.msra.mxu0 0.0
    %172 = vmatprep.subr.mxu0 0.0
    %173 = vmatpush1.msra.mxu0 %v29
    %174 = vmatprep.subr.mxu0 0.0
    %175 = vmatpush1.msra.mxu0 %v28
    %176 = vmatprep.subr.mxu0 0.0
    %177 = vmatpush1.msra.mxu0 %v27
    %178 = vmatprep.subr.mxu0 0.0
    %179 = vmatpush1.msra.mxu0 %v26
    %180 = vmatprep.subr.mxu0 0.0
    %181 = vmatpush1.msra.mxu0 %v25
    %182 = vmatprep.subr.mxu0 0.0
    %183 = vmatpush2.msra.mxu0 0.0
    %184 = vmatprep.subr.mxu0 0.0
    %185 = vmatpush2.msra.mxu0 0.0
    %186 = vmatprep.subr.mxu0 0.0
    %187 = vmatpush2.msra.mxu0 0.0
    %188 = vmatprep.subr.mxu0 0.0
    %189 = vmatpush2.msra.mxu0 0.0
    %190 = vmatprep.subr.mxu0 0.0
    %191 = vmatpush2.msra.mxu0 0.0
    %192 = vmatprep.subr.mxu0 0.0
    %193 = vmatpush2.msra.mxu0 0.0
    %194 = vmatprep.subr.mxu0 0.0
    %195 = vmatpush2.msra.mxu0 0.0
    %196 = vmatprep.subr.mxu0 0.0
    %197 = vmatpush2.msra.mxu0 0.0
    %198 = vmatprep.subr.mxu0 0.0
    %199 = vmatpush2.msra.mxu0 0.0
    %200 = vmatprep.subr.mxu0 0.0
    %201 = vmatpush2.msra.mxu0 0.0
    %202 = vmatprep.subr.mxu0 0.0
    %203 = vmatpush2.msra.mxu0 0.0
    %204 = vmatprep.subr.mxu0 0.0
    %205 = vmatpush2.msra.mxu0 0.0
    %206 = vmatprep.subr.mxu0 0.0
    %207 = vmatpush2.msra.mxu0 0.0
    %208 = vmatprep.subr.mxu0 0.0
    %209 = vmatpush2.msra.mxu0 0.0
    %210 = vmatprep.subr.mxu0 0.0
    %211 = vmatpush2.msra.mxu0 0.0
    %212 = vmatprep.subr.mxu0 0.0
    %213 = vmatpush2.msra.mxu0 0.0
    %214 = vmatprep.mubr.f32.mxu0 0.0
    %215 = vmatmul.mubr.f32.gmra.mxu0 %v139
    %v216 = vpop.f32.mrf.mxu0
    %v217 = vadd.f32 %v120, %v216
    %v218 = vpop.f32.mrf.mxu0
    %219 = vmatprep.mubr.f32.mxu0 0.0
    %220 = vmatmul.mubr.f32.gmra.mxu0 %v142
    %v221 = vpop.f32.mrf.mxu0
    %v222 = vadd.f32 %v125, %v221
    %v223 = vpop.f32.mrf.mxu0
    %224 = vmatprep.mubr.f32.mxu0 0.0
    %225 = vmatmul.mubr.f32.gmra.mxu0 %v145
    %v226 = vpop.f32.mrf.mxu0
    %v227 = vadd.f32 %v130, %v226
    %v228 = vpop.f32.mrf.mxu0
    %229 = vmatprep.mubr.f32.mxu0 0.0
    %230 = vmatmul.mubr.f32.gmra.mxu0 %v148
    %v231 = vpop.f32.mrf.mxu0
    %v232 = vadd.f32 %v135, %v231
    %v233 = vpop.f32.mrf.mxu0
    %234 = vdwg.mxu0
    %v235 = vld [vmem:[%s0 + $0x2] sm:$0xff]
    %v236 = vld [vmem:[%s0 + $0xa] sm:$0xff]
    %v237 = vld [vmem:[%s0 + $0x1a] sm:$0xff]
    %v238 = vld [vmem:[%s0 + $0x22] sm:$0xff]
    %s239 = scalar_lea.vmem %s2, 80
    %v240 = vld [vmem:[%s239] sm:$0xff]
    %v241 = vld [vmem:[%s239 + $0x8] sm:$0xff]
    %v242 = vld [vmem:[%s239 + $0x10] sm:$0xff]
    %v243 = vld [vmem:[%s239 + $0x18] sm:$0xff]
    %v244 = vld [vmem:[%s239 + $0x20] sm:$0xff]
    %v246 = vsel %vm40, %v235, 0
    %v249 = vsel %vm40, %v236, 0
    %v252 = vsel %vm40, %v237, 0
    %v255 = vsel %vm40, %v238, 0
    %257 = vmatprep.subr.mxu0 0.0
    %258 = vmatpush1.msra.mxu0 0.0
    %259 = vmatprep.subr.mxu0 0.0
    %260 = vmatpush1.msra.mxu0 0.0
    %261 = vmatprep.subr.mxu0 0.0
    %262 = vmatpush1.msra.mxu0 0.0
    %263 = vmatprep.subr.mxu0 0.0
    %264 = vmatpush1.msra.mxu0 0.0
    %265 = vmatprep.subr.mxu0 0.0
    %266 = vmatpush1.msra.mxu0 0.0
    %267 = vmatprep.subr.mxu0 0.0
    %268 = vmatpush1.msra.mxu0 0.0
    %269 = vmatprep.subr.mxu0 0.0
    %270 = vmatpush1.msra.mxu0 0.0
    %271 = vmatprep.subr.mxu0 0.0
    %272 = vmatpush1.msra.mxu0 0.0
    %273 = vmatprep.subr.mxu0 0.0
    %274 = vmatpush1.msra.mxu0 0.0
    %275 = vmatprep.subr.mxu0 0.0
    %276 = vmatpush1.msra.mxu0 0.0
    %277 = vmatprep.subr.mxu0 0.0
    %278 = vmatpush1.msra.mxu0 0.0
    %279 = vmatprep.subr.mxu0 0.0
    %280 = vmatpush1.msra.mxu0 %v244
    %281 = vmatprep.subr.mxu0 0.0
    %282 = vmatpush1.msra.mxu0 %v243
    %283 = vmatprep.subr.mxu0 0.0
    %284 = vmatpush1.msra.mxu0 %v242
    %285 = vmatprep.subr.mxu0 0.0
    %286 = vmatpush1.msra.mxu0 %v241
    %287 = vmatprep.subr.mxu0 0.0
    %288 = vmatpush1.msra.mxu0 %v240
    %289 = vmatprep.subr.mxu0 0.0
    %290 = vmatpush2.msra.mxu0 0.0
    %291 = vmatprep.subr.mxu0 0.0
    %292 = vmatpush2.msra.mxu0 0.0
    %293 = vmatprep.subr.mxu0 0.0
    %294 = vmatpush2.msra.mxu0 0.0
    %295 = vmatprep.subr.mxu0 0.0
    %296 = vmatpush2.msra.mxu0 0.0
    %297 = vmatprep.subr.mxu0 0.0
    %298 = vmatpush2.msra.mxu0 0.0
    %299 = vmatprep.subr.mxu0 0.0
    %300 = vmatpush2.msra.mxu0 0.0
    %301 = vmatprep.subr.mxu0 0.0
    %302 = vmatpush2.msra.mxu0 0.0
    %303 = vmatprep.subr.mxu0 0.0
    %304 = vmatpush2.msra.mxu0 0.0
    %305 = vmatprep.subr.mxu0 0.0
    %306 = vmatpush2.msra.mxu0 0.0
    %307 = vmatprep.subr.mxu0 0.0
    %308 = vmatpush2.msra.mxu0 0.0
    %309 = vmatprep.subr.mxu0 0.0
    %310 = vmatpush2.msra.mxu0 0.0
    %311 = vmatprep.subr.mxu0 0.0
    %312 = vmatpush2.msra.mxu0 0.0
    %313 = vmatprep.subr.mxu0 0.0
    %314 = vmatpush2.msra.mxu0 0.0
    %315 = vmatprep.subr.mxu0 0.0
    %316 = vmatpush2.msra.mxu0 0.0
    %317 = vmatprep.subr.mxu0 0.0
    %318 = vmatpush2.msra.mxu0 0.0
    %319 = vmatprep.subr.mxu0 0.0
    %320 = vmatpush2.msra.mxu0 0.0
    %321 = vmatprep.mubr.f32.mxu0 0.0
    %322 = vmatmul.mubr.f32.gmra.mxu0 %v246
    %v323 = vpop.f32.mrf.mxu0
    %v324 = vadd.f32 0.0, %v323
    %v325 = vpop.f32.mrf.mxu0
    %326 = vmatprep.mubr.f32.mxu0 0.0
    %327 = vmatmul.mubr.f32.gmra.mxu0 %v249
    %v328 = vpop.f32.mrf.mxu0
    %v329 = vadd.f32 0.0, %v328
    %v330 = vpop.f32.mrf.mxu0
    %331 = vmatprep.mubr.f32.mxu0 0.0
    %332 = vmatmul.mubr.f32.gmra.mxu0 %v252
    %v333 = vpop.f32.mrf.mxu0
    %v334 = vadd.f32 0.0, %v333
    %v335 = vpop.f32.mrf.mxu0
    %336 = vmatprep.mubr.f32.mxu0 0.0
    %337 = vmatmul.mubr.f32.gmra.mxu0 %v255
    %v338 = vpop.f32.mrf.mxu0
    %v339 = vadd.f32 0.0, %v338
    %v340 = vpop.f32.mrf.mxu0
    %341 = vdwg.mxu0
    %v342 = vadd.f32 %v217, %v324
    %v343 = vadd.f32 %v222, %v329
    %v344 = vadd.f32 %v227, %v334
    %v345 = vadd.f32 %v232, %v339
    %vm346 = vcmask 261120
    %v347 = vsel %vm346, %v342, -inf
    %v348 = vsel %vm346, %v343, -inf
    %v349 = vmax.f32 %v347, %v348
    %v350 = vrot.slane %v349, 4
    %v351 = vmax.f32 %v349, %v350
    %v352 = vrot.slane %v351, 2
    %v353 = vmax.f32 %v351, %v352
    %v354 = vrot.slane %v353, 1
    %v355 = vmax.f32 %v353, %v354
    %v356 = vsel %vm346, %v344, -inf
    %v357 = vsel %vm346, %v345, -inf
    %v358 = vmax.f32 %v356, %v357
    %v359 = vrot.slane %v358, 4
    %v360 = vmax.f32 %v358, %v359
    %v361 = vrot.slane %v360, 2
    %v362 = vmax.f32 %v360, %v361
    %v363 = vrot.slane %v362, 1
    %v364 = vmax.f32 %v362, %v363
    %v365 = vld [vmem:[%s3] sm:$0xff]
    %v366 = vld [vmem:[%s3 + $0x8] sm:$0xff]
    %v367 = vld [vmem:[%s3 + $0x10] sm:$0xff]
    %v368 = vld [vmem:[%s3 + $0x18] sm:$0xff]
    %vm371 = vcmask 1041409
    %v372 = vsel %vm371, %v364, %v355
    %v373 = vsel %vm346, %v372, 0
    %375 = vmatprep.subr.mxu0 0.0
    %376 = vmatpush1.msra.mxu0 0.0
    %377 = vmatprep.subr.mxu0 0.0
    %378 = vmatpush1.msra.mxu0 0.0
    %379 = vmatprep.subr.mxu0 0.0
    %380 = vmatpush1.msra.mxu0 0.0
    %381 = vmatprep.subr.mxu0 0.0
    %382 = vmatpush1.msra.mxu0 0.0
    %383 = vmatprep.subr.mxu0 0.0
    %384 = vmatpush1.msra.mxu0 0.0
    %385 = vmatprep.subr.mxu0 0.0
    %386 = vmatpush1.msra.mxu0 0.0
    %387 = vmatprep.subr.mxu0 0.0
    %388 = vmatpush1.msra.mxu0 0.0
    %389 = vmatprep.subr.mxu0 0.0
    %390 = vmatpush1.msra.mxu0 0.0
    %391 = vmatprep.subr.mxu0 0.0
    %392 = vmatpush1.msra.mxu0 0.0
    %393 = vmatprep.subr.mxu0 0.0
    %394 = vmatpush1.msra.mxu0 0.0
    %395 = vmatprep.subr.mxu0 0.0
    %396 = vmatpush1.msra.mxu0 0.0
    %397 = vmatprep.subr.mxu0 0.0
    %398 = vmatpush1.msra.mxu0 0.0
    %399 = vmatprep.subr.mxu0 0.0
    %400 = vmatpush1.msra.mxu0 %v368
    %401 = vmatprep.subr.mxu0 0.0
    %402 = vmatpush1.msra.mxu0 %v367
    %403 = vmatprep.subr.mxu0 0.0
    %404 = vmatpush1.msra.mxu0 %v366
    %405 = vmatprep.subr.mxu0 0.0
    %406 = vmatpush1.msra.mxu0 %v365
    %407 = vmatprep.subr.mxu0 0.0
    %408 = vmatpush2.msra.mxu0 0.0
    %409 = vmatprep.subr.mxu0 0.0
    %410 = vmatpush2.msra.mxu0 0.0
    %411 = vmatprep.subr.mxu0 0.0
    %412 = vmatpush2.msra.mxu0 0.0
    %413 = vmatprep.subr.mxu0 0.0
    %414 = vmatpush2.msra.mxu0 0.0
    %415 = vmatprep.subr.mxu0 0.0
    %416 = vmatpush2.msra.mxu0 0.0
    %417 = vmatprep.subr.mxu0 0.0
    %418 = vmatpush2.msra.mxu0 0.0
    %419 = vmatprep.subr.mxu0 0.0
    %420 = vmatpush2.msra.mxu0 0.0
    %421 = vmatprep.subr.mxu0 0.0
    %422 = vmatpush2.msra.mxu0 0.0
    %423 = vmatprep.subr.mxu0 0.0
    %424 = vmatpush2.msra.mxu0 0.0
    %425 = vmatprep.subr.mxu0 0.0
    %426 = vmatpush2.msra.mxu0 0.0
    %427 = vmatprep.subr.mxu0 0.0
    %428 = vmatpush2.msra.mxu0 0.0
    %429 = vmatprep.subr.mxu0 0.0
    %430 = vmatpush2.msra.mxu0 0.0
    %431 = vmatprep.subr.mxu0 0.0
    %432 = vmatpush2.msra.mxu0 0.0
    %433 = vmatprep.subr.mxu0 0.0
    %434 = vmatpush2.msra.mxu0 0.0
    %435 = vmatprep.subr.mxu0 0.0
    %436 = vmatpush2.msra.mxu0 0.0
    %437 = vmatprep.subr.mxu0 0.0
    %438 = vmatpush2.msra.mxu0 0.0
    %439 = vmatprep.mubr.f32.mxu0 0.0
    %440 = vmatmul.mubr.f32.gmra.mxu0 %v373
    %v441 = vpop.f32.mrf.mxu0
    %v442 = vadd.f32 0.0, %v441
    %v443 = vpop.f32.mrf.mxu0
    %444 = vdwg.mxu0
    %v445 = vtanh.pop %v442
    %v446 = vld [vmem:[%s1] sm:$0x3]
    %v447 = vld [vmem:[%s4] sm:$0xff]
    %v448 = vld [vmem:[%s4 + $0x8] sm:$0xff]
    %v449 = vld [vmem:[%s4 + $0x10] sm:$0xff]
    %v450 = vld [vmem:[%s4 + $0x18] sm:$0xff]
    %v451 = vld [vmem:[%s4 + $0x20] sm:$0xff]
    %v452 = vld [vmem:[%s4 + $0x28] sm:$0xff]
    %v453 = vld [vmem:[%s4 + $0x30] sm:$0xff]
    %v454 = vld [vmem:[%s4 + $0x38] sm:$0xff]
    %v455 = vld [vmem:[%s4 + $0x40] sm:$0xff]
    %v456 = vld [vmem:[%s4 + $0x48] sm:$0xff]
    %v457 = vld [vmem:[%s4 + $0x50] sm:$0xff]
    %v458 = vld [vmem:[%s4 + $0x58] sm:$0xff]
    %v459 = vld [vmem:[%s4 + $0x60] sm:$0xff]
    %v460 = vld [vmem:[%s4 + $0x68] sm:$0xff]
    %v461 = vld [vmem:[%s4 + $0x70] sm:$0xff]
    %v462 = vld [vmem:[%s4 + $0x78] sm:$0xff]
    %v464 = vsel %vm346, %v445, 0
    %466 = vmatprep.subr.mxu0 0.0
    %467 = vmatpush1.msra.mxu0 0.0
    %468 = vmatprep.subr.mxu0 0.0
    %469 = vmatpush1.msra.mxu0 0.0
    %470 = vmatprep.subr.mxu0 0.0
    %471 = vmatpush1.msra.mxu0 0.0
    %472 = vmatprep.subr.mxu0 0.0
    %473 = vmatpush1.msra.mxu0 0.0
    %474 = vmatprep.subr.mxu0 0.0
    %475 = vmatpush1.msra.mxu0 0.0
    %476 = vmatprep.subr.mxu0 0.0
    %477 = vmatpush1.msra.mxu0 0.0
    %478 = vmatprep.subr.mxu0 0.0
    %479 = vmatpush1.msra.mxu0 0.0
    %480 = vmatprep.subr.mxu0 0.0
    %481 = vmatpush1.msra.mxu0 0.0
    %482 = vmatprep.subr.mxu0 0.0
    %483 = vmatpush1.msra.mxu0 0.0
    %484 = vmatprep.subr.mxu0 0.0
    %485 = vmatpush1.msra.mxu0 0.0
    %486 = vmatprep.subr.mxu0 0.0
    %487 = vmatpush1.msra.mxu0 0.0
    %488 = vmatprep.subr.mxu0 0.0
    %489 = vmatpush1.msra.mxu0 0.0
    %490 = vmatprep.subr.mxu0 0.0
    %491 = vmatpush1.msra.mxu0 %v462
    %492 = vmatprep.subr.mxu0 0.0
    %493 = vmatpush1.msra.mxu0 %v461
    %494 = vmatprep.subr.mxu0 0.0
    %495 = vmatpush1.msra.mxu0 %v460
    %496 = vmatprep.subr.mxu0 0.0
    %497 = vmatpush1.msra.mxu0 %v459
    %498 = vmatprep.subr.mxu0 0.0
    %499 = vmatpush2.msra.mxu0 0.0
    %500 = vmatprep.subr.mxu0 0.0
    %501 = vmatpush2.msra.mxu0 0.0
    %502 = vmatprep.subr.mxu0 0.0
    %503 = vmatpush2.msra.mxu0 0.0
    %504 = vmatprep.subr.mxu0 0.0
    %505 = vmatpush2.msra.mxu0 0.0
    %506 = vmatprep.subr.mxu0 0.0
    %507 = vmatpush2.msra.mxu0 0.0
    %508 = vmatprep.subr.mxu0 0.0
    %509 = vmatpush2.msra.mxu0 0.0
    %510 = vmatprep.subr.mxu0 0.0
    %511 = vmatpush2.msra.mxu0 0.0
    %512 = vmatprep.subr.mxu0 0.0
    %513 = vmatpush2.msra.mxu0 0.0
    %514 = vmatprep.subr.mxu0 0.0
    %515 = vmatpush2.msra.mxu0 0.0
    %516 = vmatprep.subr.mxu0 0.0
    %517 = vmatpush2.msra.mxu0 0.0
    %518 = vmatprep.subr.mxu0 0.0
    %519 = vmatpush2.msra.mxu0 0.0
    %520 = vmatprep.subr.mxu0 0.0
    %521 = vmatpush2.msra.mxu0 0.0
    %522 = vmatprep.subr.mxu0 0.0
    %523 = vmatpush2.msra.mxu0 0.0
    %524 = vmatprep.subr.mxu0 0.0
    %525 = vmatpush2.msra.mxu0 0.0
    %526 = vmatprep.subr.mxu0 0.0
    %527 = vmatpush2.msra.mxu0 0.0
    %528 = vmatprep.subr.mxu0 0.0
    %529 = vmatpush2.msra.mxu0 0.0
    %530 = vmatprep.mubr.f32.mxu0 0.0
    %531 = vmatmul.mubr.f32.gmra.mxu0 %v464
    %v532 = vpop.f32.mrf.mxu0
    %v533 = vadd.f32 0.0, %v532
    %v534 = vpop.f32.mrf.mxu0
    %535 = vdwg.mxu0
    %vm536 = vcmask 785408
    %v538 = vsel %vm536, %v446, 0
    %540 = vmatprep.subr.mxu0 0.0
    %541 = vmatpush1.msra.mxu0 0.0
    %542 = vmatprep.subr.mxu0 0.0
    %543 = vmatpush1.msra.mxu0 0.0
    %544 = vmatprep.subr.mxu0 0.0
    %545 = vmatpush1.msra.mxu0 0.0
    %546 = vmatprep.subr.mxu0 0.0
    %547 = vmatpush1.msra.mxu0 0.0
    %548 = vmatprep.subr.mxu0 0.0
    %549 = vmatpush1.msra.mxu0 %v458
    %550 = vmatprep.subr.mxu0 0.0
    %551 = vmatpush1.msra.mxu0 %v457
    %552 = vmatprep.subr.mxu0 0.0
    %553 = vmatpush1.msra.mxu0 %v456
    %554 = vmatprep.subr.mxu0 0.0
    %555 = vmatpush1.msra.mxu0 %v455
    %556 = vmatprep.subr.mxu0 0.0
    %557 = vmatpush1.msra.mxu0 %v454
    %558 = vmatprep.subr.mxu0 0.0
    %559 = vmatpush1.msra.mxu0 %v453
    %560 = vmatprep.subr.mxu0 0.0
    %561 = vmatpush1.msra.mxu0 %v452
    %562 = vmatprep.subr.mxu0 0.0
    %563 = vmatpush1.msra.mxu0 %v451
    %564 = vmatprep.subr.mxu0 0.0
    %565 = vmatpush1.msra.mxu0 %v450
    %566 = vmatprep.subr.mxu0 0.0
    %567 = vmatpush1.msra.mxu0 %v449
    %568 = vmatprep.subr.mxu0 0.0
    %569 = vmatpush1.msra.mxu0 %v448
    %570 = vmatprep.subr.mxu0 0.0
    %571 = vmatpush1.msra.mxu0 %v447
    %572 = vmatprep.subr.mxu0 0.0
    %573 = vmatpush2.msra.mxu0 0.0
    %574 = vmatprep.subr.mxu0 0.0
    %575 = vmatpush2.msra.mxu0 0.0
    %576 = vmatprep.subr.mxu0 0.0
    %577 = vmatpush2.msra.mxu0 0.0
    %578 = vmatprep.subr.mxu0 0.0
    %579 = vmatpush2.msra.mxu0 0.0
    %580 = vmatprep.subr.mxu0 0.0
    %581 = vmatpush2.msra.mxu0 0.0
    %582 = vmatprep.subr.mxu0 0.0
    %583 = vmatpush2.msra.mxu0 0.0
    %584 = vmatprep.subr.mxu0 0.0
    %585 = vmatpush2.msra.mxu0 0.0
    %586 = vmatprep.subr.mxu0 0.0
    %587 = vmatpush2.msra.mxu0 0.0
    %588 = vmatprep.subr.mxu0 0.0
    %589 = vmatpush2.msra.mxu0 0.0
    %590 = vmatprep.subr.mxu0 0.0
    %591 = vmatpush2.msra.mxu0 0.0
    %592 = vmatprep.subr.mxu0 0.0
    %593 = vmatpush2.msra.mxu0 0.0
    %594 = vmatprep.subr.mxu0 0.0
    %595 = vmatpush2.msra.mxu0 0.0
    %596 = vmatprep.subr.mxu0 0.0
    %597 = vmatpush2.msra.mxu0 0.0
    %598 = vmatprep.subr.mxu0 0.0
    %599 = vmatpush2.msra.mxu0 0.0
    %600 = vmatprep.subr.mxu0 0.0
    %601 = vmatpush2.msra.mxu0 0.0
    %602 = vmatprep.subr.mxu0 0.0
    %603 = vmatpush2.msra.mxu0 0.0
    %604 = vmatprep.mubr.f32.mxu0 0.0
    %605 = vmatmul.mubr.f32.gmra.mxu0 %v538
    %v606 = vpop.f32.mrf.mxu0
    %v607 = vadd.f32 %v533, %v606
    %v608 = vpop.f32.mrf.mxu0
    %609 = vdwg.mxu0
    %610 = vst [vmem:[#allocation2] sm:$0x3] %v607
    // Predicated region
    $region22: #{rc2dnn_forward.1} parent=1 // pred_check
      _
    $region23: #{rc2dnn_forward.1} parent=1 // pred_check_branch
      %612 = sbr.rel (0) target = $region25
    $region24: #{rc2dnn_forward.1} parent=1 // pred_region
      %s614 = ssub.s32 32, 32
      %615 = vsyncadd [#allocation3], %s614
      %s617 = sshll.u32 [#allocation2], 4
      %s618 = int_to_ptr.vmem [resolvable:$true] %s617
      %620 = dma.vmem_to_hbm [thread:$0]  %s618, 32, %s5, [#allocation3]
    $region25: #{rc2dnn_forward.1} parent=1 // pred_fallthru
      _
    // Predicated region
    $region26: #{rc2dnn_forward.1} parent=1 // pred_check
      _
    $region27: #{rc2dnn_forward.1} parent=1 // pred_check_branch
      %622 = sbr.rel (0) target = $region29
    $region28: #{rc2dnn_forward.1} parent=1 // pred_region
      %623 = dma.done [#allocation3], 32
    $region29: #{rc2dnn_forward.1} parent=1 // pred_fallthru
      _
    %624 = vsyncpa [#allocation3], 1

</llo_original>
